<compile_context>
chip_gen: v5e
topology: v5e:2x2
jax: 0.10.0
libtpu: 0.0.40
codegen_flags: <defaults>
</compile_context>

<pallas_src>
import functools

import jax
import jax.numpy as jnp
from jax.experimental import pallas as pl
from jax.experimental.pallas import tpu as pltpu


def _round_up(x, m):
    return ((x + m - 1) // m) * m


def ssd_fused_kernel(h_ref, wr_ref, br_ref, wlm_ref, out_ref, draft_ref, *,
                     num_groups, hidden, tm):
    """Fused router + lm_head tile kernel.

    Grid: (m_tiles, v_tiles), V innermost ("arbitrary").
      h_ref:     (TM, H)      bf16 hidden tile        (VMEM-resident across V)
      wr_ref:    (H, G*H)     bf16 fused router weight (resident)
      br_ref:    (1, G*H)     bf16 fused router bias   (resident)
      wlm_ref:   (H, TV)      bf16 lm_head weight tile (streamed along V)
      out_ref:   (G, TM, TV)  bf16 draft-logit tile    (lane-dense writes)
      draft_ref: (G*TM, H)    bf16 scratch: router output reused across V tiles
    """
    v_idx = pl.program_id(1)

    # Router hot path is independent of the V tile -> compute once per m tile.
    @pl.when(v_idx == 0)
    def _():
        h = h_ref[...]                                       # (TM, H) bf16
        # One wide matmul covering all G groups (fills MXU lanes when H is small).
        z = jnp.dot(h, wr_ref[...], preferred_element_type=jnp.float32)
        z = z + br_ref[...].astype(jnp.float32)              # (TM, G*H)
        hf = h.astype(jnp.float32)
        for g in range(num_groups):                          # static unroll
            zg = z[:, g * hidden:(g + 1) * hidden]           # static lane slice
            dg = hf + zg * jax.nn.sigmoid(zg)                # SiLU + residual
            draft_ref[g * tm:(g + 1) * tm, :] = dg.astype(draft_ref.dtype)

    # lm_head hot path: all G groups batched into the MXU M dimension,
    # bf16 x bf16 with f32 accumulation.
    logits = jnp.dot(draft_ref[...], wlm_ref[...],
                     preferred_element_type=jnp.float32)     # (G*TM, TV)
    for g in range(num_groups):                              # static unroll
        out_ref[g] = logits[g * tm:(g + 1) * tm, :].astype(out_ref.dtype)


def prepare_ssd_params(w_router, b_router, w_lm, *, tv_target=512):
    """One-time weight preparation: f32->bf16 casts, group fusion and vocab
    padding are hoisted out of the per-call forward (no per-forward weight
    HBM roundtrip)."""
    G, H, H2 = w_router.shape
    assert H == H2, (H, H2)
    V = w_lm.shape[1]

    # Fused router weight: columns [g*H:(g+1)*H] == w_router[g].
    w_router_fused = jnp.transpose(w_router, (1, 0, 2)).reshape(H, G * H)
    b_router_fused = b_router.reshape(1, G * H)

    # Vocab tile (128/256-aligned) and one-time padding of the lm_head weight.
    if V > tv_target:
        tv = tv_target
    else:
        tv = _round_up(V, 128)
    v_pad = _round_up(V, tv)
    w_lm_padded = jnp.pad(w_lm, ((0, 0), (0, v_pad - V)))

    return dict(
        w_router_fused=w_router_fused.astype(jnp.bfloat16),
        b_router_fused=b_router_fused.astype(jnp.bfloat16),
        w_lm_padded=w_lm_padded.astype(jnp.bfloat16),
        num_groups=G, hidden=H, vocab=V, tv=tv,
    )


def ssd_forward(hidden_states, params, *, tm_target=256, last_token_only=False):
    """hidden_states: [B, S, H].  Returns draft logits [G, B, S, V] (bf16), or
    [G, B, 1, V] when last_token_only=True (topK_generate only consumes the
    last position)."""
    G = params["num_groups"]
    H = params["hidden"]
    V = params["vocab"]
    TV = params["tv"]
    wr = params["w_router_fused"]
    br = params["b_router_fused"]
    wlm = params["w_lm_padded"]
    v_pad = wlm.shape[1]

    if last_token_only:
        hidden_states = hidden_states[:, -1:, :]
    B, S, H2 = hidden_states.shape
    assert H2 == H, (H2, H)

    M = B * S
    if M <= tm_target:
        TM = _round_up(M, 16)        # >=16 for bf16 sublane packing
        M_pad = TM
    else:
        TM = tm_target               # 256-aligned for v6e/v7x 2x256^2 MXU
        M_pad = _round_up(M, TM)
    m_tiles = M_pad // TM
    v_tiles = v_pad // TV

    h2d = hidden_states.reshape(M, H).astype(jnp.bfloat16)
    if M_pad != M:
        h2d = jnp.pad(h2d, ((0, M_pad - M), (0, 0)))

    # VMEM budget (double buffers counted once) + headroom; capped well below
    # v7x's 64 MiB per-TC VMEM.
    itemsize = 2
    vmem_bytes = itemsize * (
        2 * TM * H                       # hidden tile (double-buffered)
        + 2 * H * G * H + 2 * G * H      # fused router weight / bias
        + 2 * H * TV                     # lm_head weight tile (double-buffered)
        + 2 * G * TM * TV                # output tile (double-buffered)
        + G * TM * H)                    # draft_h scratch
    vmem_limit = int(min(max(vmem_bytes + (4 << 20), 32 << 20), 48 << 20))

    cost = pl.CostEstimate(
        flops=2 * M * H * G * H + 2 * G * M * H * V,
        transcendentals=M * G * H,
        bytes_accessed=itemsize * (M_pad * H + H * G * H + G * H
                                   + H * v_pad + G * M_pad * v_pad),
    )

    kernel = functools.partial(ssd_fused_kernel, num_groups=G, hidden=H, tm=TM)

    out = pl.pallas_call(
        kernel,
        out_shape=jax.ShapeDtypeStruct((G, M_pad, v_pad), jnp.bfloat16),
        grid_spec=pltpu.PrefetchScalarGridSpec(
            num_scalar_prefetch=0,
            grid=(m_tiles, v_tiles),
            in_specs=[
                # hidden tile: constant over V -> no re-DMA in the inner loop
                pl.BlockSpec((TM, H), lambda m, v: (m, 0)),
                # fused router weight / bias: constant over the whole grid
                pl.BlockSpec((H, G * H), lambda m, v: (0, 0)),
                pl.BlockSpec((1, G * H), lambda m, v: (0, 0)),
                # lm_head weight: streamed along the inner V axis
                # (read m_tiles times total; exactly once at decode sizes)
                pl.BlockSpec((H, TV), lambda m, v: (0, v)),
            ],
            out_specs=pl.BlockSpec((G, TM, TV), lambda m, v: (0, m, v)),
            scratch_shapes=[pltpu.VMEM((G * TM, H), jnp.bfloat16)],
        ),
        compiler_params=pltpu.CompilerParams(
            dimension_semantics=("parallel", "arbitrary"),
            vmem_limit_bytes=vmem_limit,
        ),
        cost_estimate=cost,
    )(h2d, wr, br, wlm)

    out = out[:, :M, :V]
    return out.reshape(G, B, S, V)


def ssd_forward_ref(hidden_states, w_router, b_router, w_lm):
    """Pure-JAX reference mirroring the kernel's bf16-operand / f32-accum path."""
    B, S, H = hidden_states.shape
    G = w_router.shape[0]
    V = w_lm.shape[1]
    f = lambda x: x.astype(jnp.bfloat16).astype(jnp.float32)
    h = f(hidden_states.reshape(B * S, H))
    wr, br, wlm = f(w_router), f(b_router), f(w_lm)
    z = jnp.einsum("mh,ghk->gmk", h, wr) + br[:, None, :]
    draft = h[None] + z * jax.nn.sigmoid(z)
    draft = draft.astype(jnp.bfloat16).astype(jnp.float32)
    logits = jnp.einsum("gmh,hv->gmv", draft, wlm)
    return logits.reshape(G, B, S, V)


if __name__ == "__main__":
    # Small, TPU-tile-friendly shapes consistent with the module's forward:
    #   batch=2, seq=8, hidden (attn_hid_dim)=32, vocab=256, top_k_group=4
    B, S, H, V, G = 2, 8, 32, 256, 4

    key = jax.random.PRNGKey(0)
    k_h, k_wr, k_br, k_lm = jax.random.split(key, 4)

    hidden_states = jax.random.normal(k_h, (B, S, H), dtype=jnp.float32)
    w_router = jax.random.normal(k_wr, (G, H, H), dtype=jnp.float32) * 0.05
    b_router = jax.random.normal(k_br, (G, H), dtype=jnp.float32) * 0.05
    w_lm = jax.random.normal(k_lm, (H, V), dtype=jnp.float32) * 0.05

    # One-time weight prep (bf16 cast, group fusion, vocab padding).
    params = prepare_ssd_params(w_router, b_router, w_lm)

    # Full forward (matches SSDModel.forward semantics: logits for all positions).
    draft_logits = jax.block_until_ready(ssd_forward(hidden_states, params))
    assert draft_logits.shape == (G, B, S, V), draft_logits.shape

    ref = ssd_forward_ref(hidden_states, w_router, b_router, w_lm)
    assert jnp.allclose(draft_logits.astype(jnp.float32), ref,
                        atol=2e-2, rtol=2e-2), (
        "Pallas kernel mismatch vs reference")

    # Reduced last-token path (all topK_generate consumes); must agree with the
    # last slice of the full forward.
    last = jax.block_until_ready(
        ssd_forward(hidden_states, params, last_token_only=True))
    assert last.shape == (G, B, 1, V), last.shape
    assert jnp.allclose(last.astype(jnp.float32),
                        draft_logits[:, :, -1:, :].astype(jnp.float32),
                        atol=2e-2, rtol=2e-2), (
        "last_token_only path mismatch vs full forward")

    print("KERNEL_OK")
</pallas_src>

<mosaic_0001>
module attributes {stable_mosaic.version = 11 : i64} {
  func.func @ssd_fused_kernel(%arg0: i32, %arg1: i32, %arg2: memref<16x32xbf16, #tpu.memory_space<vmem>>, %arg3: memref<32x128xbf16, #tpu.memory_space<vmem>>, %arg4: memref<1x128xbf16, #tpu.memory_space<vmem>>, %arg5: memref<32x256xbf16, #tpu.memory_space<vmem>>, %arg6: memref<4x16x256xbf16, #tpu.memory_space<vmem>>, %arg7: memref<64x32xbf16, #tpu.memory_space<vmem>>) attributes {dimension_semantics = [#tpu.dimension_semantics<parallel>, #tpu.dimension_semantics<arbitrary>], iteration_bounds = array<i64: 1, 1>, scalar_prefetch = 0 : i64, scratch_operands = 1 : i64, tpu.core_type = #tpu.core_type<tc>, window_params = [{transform_indices = @transform_0, window_bounds = array<i64: 16, 32>}, {pipeline_mode = #tpu.pipeline_mode<synchronous>, transform_indices = @transform_1, window_bounds = array<i64: 32, 128>}, {pipeline_mode = #tpu.pipeline_mode<synchronous>, transform_indices = @transform_2, window_bounds = array<i64: 1, 128>}, {transform_indices = @transform_3, window_bounds = array<i64: 32, 256>}, {transform_indices = @transform_4, window_bounds = array<i64: 4, 16, 256>}]} {
    %c0_i32 = arith.constant 0 : i32
    %0 = arith.cmpi eq, %arg1, %c0_i32 : i32
    %1 = arith.extui %0 : i1 to i32
    %c0_i32_0 = arith.constant 0 : i32
    %2 = arith.cmpi ne, %1, %c0_i32_0 : i32
    scf.if %2 {
      %c0_13 = arith.constant 0 : index
      %c0_14 = arith.constant 0 : index
      %26 = vector.load %arg2[%c0_13, %c0_14] : memref<16x32xbf16, #tpu.memory_space<vmem>>, vector<16x32xbf16>
      %c0_15 = arith.constant 0 : index
      %c0_16 = arith.constant 0 : index
      %27 = vector.load %arg3[%c0_15, %c0_16] : memref<32x128xbf16, #tpu.memory_space<vmem>>, vector<32x128xbf16>
      %cst_17 = arith.constant dense<0.000000e+00> : vector<16x128xf32>
      %28 = tpu.matmul %26, %27, %cst_17 {dimension_numbers = #tpu.dot_dimension_numbers<[1], [0], [0], [1], [0, 0, 1, 1], [], []>} : vector<16x32xbf16>, vector<32x128xbf16>, vector<16x128xf32> -> vector<16x128xf32>
      %c0_18 = arith.constant 0 : index
      %c0_19 = arith.constant 0 : index
      %29 = vector.load %arg4[%c0_18, %c0_19] : memref<1x128xbf16, #tpu.memory_space<vmem>>, vector<1x128xbf16>
      %30 = arith.extf %29 : vector<1x128xbf16> to vector<1x128xf32>
      %31 = vector.broadcast %30 : vector<1x128xf32> to vector<16x128xf32>
      %32 = arith.addf %28, %31 : vector<16x128xf32>
      %33 = arith.extf %26 : vector<16x32xbf16> to vector<16x32xf32>
      %34 = vector.extract_strided_slice %32 {offsets = [0, 0], sizes = [16, 32], strides = [1, 1]} : vector<16x128xf32> to vector<16x32xf32>
      %35 = arith.negf %34 : vector<16x32xf32>
      %36 = math.exp %35 : vector<16x32xf32>
      %cst_20 = arith.constant 1.000000e+00 : f32
      %37 = vector.broadcast %cst_20 : f32 to vector<16x32xf32>
      %38 = arith.addf %37, %36 : vector<16x32xf32>
      %39 = arith.divf %37, %38 : vector<16x32xf32>
      %40 = arith.mulf %34, %39 : vector<16x32xf32>
      %41 = arith.addf %33, %40 : vector<16x32xf32>
      %42 = arith.truncf %41 : vector<16x32xf32> to vector<16x32xbf16>
      %c0_21 = arith.constant 0 : index
      %c0_22 = arith.constant 0 : index
      %43 = vector.load %arg7[%c0_21, %c0_22] : memref<64x32xbf16, #tpu.memory_space<vmem>>, vector<16x32xbf16>
      tpu.vector_store %arg7[%c0_21, %c0_22], %42 {strides = array<i32>} : memref<64x32xbf16, #tpu.memory_space<vmem>>, vector<16x32xbf16>,
      %44 = vector.extract_strided_slice %32 {offsets = [0, 32], sizes = [16, 32], strides = [1, 1]} : vector<16x128xf32> to vector<16x32xf32>
      %45 = arith.negf %44 : vector<16x32xf32>
      %46 = math.exp %45 : vector<16x32xf32>
      %cst_23 = arith.constant 1.000000e+00 : f32
      %47 = vector.broadcast %cst_23 : f32 to vector<16x32xf32>
      %48 = arith.addf %47, %46 : vector<16x32xf32>
      %49 = arith.divf %47, %48 : vector<16x32xf32>
      %50 = arith.mulf %44, %49 : vector<16x32xf32>
      %51 = arith.addf %33, %50 : vector<16x32xf32>
      %52 = arith.truncf %51 : vector<16x32xf32> to vector<16x32xbf16>
      %c16 = arith.constant 16 : index
      %c0_24 = arith.constant 0 : index
      %53 = vector.load %arg7[%c16, %c0_24] : memref<64x32xbf16, #tpu.memory_space<vmem>>, vector<16x32xbf16>
      tpu.vector_store %arg7[%c16, %c0_24], %52 {strides = array<i32>} : memref<64x32xbf16, #tpu.memory_space<vmem>>, vector<16x32xbf16>,
      %54 = vector.extract_strided_slice %32 {offsets = [0, 64], sizes = [16, 32], strides = [1, 1]} : vector<16x128xf32> to vector<16x32xf32>
      %55 = arith.negf %54 : vector<16x32xf32>
      %56 = math.exp %55 : vector<16x32xf32>
      %cst_25 = arith.constant 1.000000e+00 : f32
      %57 = vector.broadcast %cst_25 : f32 to vector<16x32xf32>
      %58 = arith.addf %57, %56 : vector<16x32xf32>
      %59 = arith.divf %57, %58 : vector<16x32xf32>
      %60 = arith.mulf %54, %59 : vector<16x32xf32>
      %61 = arith.addf %33, %60 : vector<16x32xf32>
      %62 = arith.truncf %61 : vector<16x32xf32> to vector<16x32xbf16>
      %c32 = arith.constant 32 : index
      %c0_26 = arith.constant 0 : index
      %63 = vector.load %arg7[%c32, %c0_26] : memref<64x32xbf16, #tpu.memory_space<vmem>>, vector<16x32xbf16>
      tpu.vector_store %arg7[%c32, %c0_26], %62 {strides = array<i32>} : memref<64x32xbf16, #tpu.memory_space<vmem>>, vector<16x32xbf16>,
      %64 = vector.extract_strided_slice %32 {offsets = [0, 96], sizes = [16, 32], strides = [1, 1]} : vector<16x128xf32> to vector<16x32xf32>
      %65 = arith.negf %64 : vector<16x32xf32>
      %66 = math.exp %65 : vector<16x32xf32>
      %cst_27 = arith.constant 1.000000e+00 : f32
      %67 = vector.broadcast %cst_27 : f32 to vector<16x32xf32>
      %68 = arith.addf %67, %66 : vector<16x32xf32>
      %69 = arith.divf %67, %68 : vector<16x32xf32>
      %70 = arith.mulf %64, %69 : vector<16x32xf32>
      %71 = arith.addf %33, %70 : vector<16x32xf32>
      %72 = arith.truncf %71 : vector<16x32xf32> to vector<16x32xbf16>
      %c48 = arith.constant 48 : index
      %c0_28 = arith.constant 0 : index
      %73 = vector.load %arg7[%c48, %c0_28] : memref<64x32xbf16, #tpu.memory_space<vmem>>, vector<16x32xbf16>
      tpu.vector_store %arg7[%c48, %c0_28], %72 {strides = array<i32>} : memref<64x32xbf16, #tpu.memory_space<vmem>>, vector<16x32xbf16>,
    } else {
    }
    %c0 = arith.constant 0 : index
    %c0_1 = arith.constant 0 : index
    %3 = vector.load %arg7[%c0, %c0_1] : memref<64x32xbf16, #tpu.memory_space<vmem>>, vector<64x32xbf16>
    %c0_2 = arith.constant 0 : index
    %c0_3 = arith.constant 0 : index
    %4 = vector.load %arg5[%c0_2, %c0_3] : memref<32x256xbf16, #tpu.memory_space<vmem>>, vector<32x256xbf16>
    %cst = arith.constant dense<0.000000e+00> : vector<64x256xf32>
    %5 = tpu.matmul %3, %4, %cst {dimension_numbers = #tpu.dot_dimension_numbers<[1], [0], [0], [1], [0, 0, 1, 1], [], []>} : vector<64x32xbf16>, vector<32x256xbf16>, vector<64x256xf32> -> vector<64x256xf32>
    %6 = vector.extract_strided_slice %5 {offsets = [0, 0], sizes = [16, 256], strides = [1, 1]} : vector<64x256xf32> to vector<16x256xf32>
    %7 = arith.truncf %6 : vector<16x256xf32> to vector<16x256xbf16>
    %c0_4 = arith.constant 0 : index
    %c0_5 = arith.constant 0 : index
    %c0_6 = arith.constant 0 : index
    %8 = vector.load %arg6[%c0_4, %c0_5, %c0_6] : memref<4x16x256xbf16, #tpu.memory_space<vmem>>, vector<1x16x256xbf16>
    %9 = vector.shape_cast %8 : vector<1x16x256xbf16> to vector<16x256xbf16>
    %10 = vector.shape_cast %7 : vector<16x256xbf16> to vector<1x16x256xbf16>
    tpu.vector_store %arg6[%c0_4, %c0_5, %c0_6], %10 {strides = array<i32>} : memref<4x16x256xbf16, #tpu.memory_space<vmem>>, vector<1x16x256xbf16>,
    %11 = vector.extract_strided_slice %5 {offsets = [16, 0], sizes = [16, 256], strides = [1, 1]} : vector<64x256xf32> to vector<16x256xf32>
    %12 = arith.truncf %11 : vector<16x256xf32> to vector<16x256xbf16>
    %c1 = arith.constant 1 : index
    %c0_7 = arith.constant 0 : index
    %c0_8 = arith.constant 0 : index
    %13 = vector.load %arg6[%c1, %c0_7, %c0_8] : memref<4x16x256xbf16, #tpu.memory_space<vmem>>, vector<1x16x256xbf16>
    %14 = vector.shape_cast %13 : vector<1x16x256xbf16> to vector<16x256xbf16>
    %15 = vector.shape_cast %12 : vector<16x256xbf16> to vector<1x16x256xbf16>
    tpu.vector_store %arg6[%c1, %c0_7, %c0_8], %15 {strides = array<i32>} : memref<4x16x256xbf16, #tpu.memory_space<vmem>>, vector<1x16x256xbf16>,
    %16 = vector.extract_strided_slice %5 {offsets = [32, 0], sizes = [16, 256], strides = [1, 1]} : vector<64x256xf32> to vector<16x256xf32>
    %17 = arith.truncf %16 : vector<16x256xf32> to vector<16x256xbf16>
    %c2 = arith.constant 2 : index
    %c0_9 = arith.constant 0 : index
    %c0_10 = arith.constant 0 : index
    %18 = vector.load %arg6[%c2, %c0_9, %c0_10] : memref<4x16x256xbf16, #tpu.memory_space<vmem>>, vector<1x16x256xbf16>
    %19 = vector.shape_cast %18 : vector<1x16x256xbf16> to vector<16x256xbf16>
    %20 = vector.shape_cast %17 : vector<16x256xbf16> to vector<1x16x256xbf16>
    tpu.vector_store %arg6[%c2, %c0_9, %c0_10], %20 {strides = array<i32>} : memref<4x16x256xbf16, #tpu.memory_space<vmem>>, vector<1x16x256xbf16>,
    %21 = vector.extract_strided_slice %5 {offsets = [48, 0], sizes = [16, 256], strides = [1, 1]} : vector<64x256xf32> to vector<16x256xf32>
    %22 = arith.truncf %21 : vector<16x256xf32> to vector<16x256xbf16>
    %c3 = arith.constant 3 : index
    %c0_11 = arith.constant 0 : index
    %c0_12 = arith.constant 0 : index
    %23 = vector.load %arg6[%c3, %c0_11, %c0_12] : memref<4x16x256xbf16, #tpu.memory_space<vmem>>, vector<1x16x256xbf16>
    %24 = vector.shape_cast %23 : vector<1x16x256xbf16> to vector<16x256xbf16>
    %25 = vector.shape_cast %22 : vector<16x256xbf16> to vector<1x16x256xbf16>
    tpu.vector_store %arg6[%c3, %c0_11, %c0_12], %25 {strides = array<i32>} : memref<4x16x256xbf16, #tpu.memory_space<vmem>>, vector<1x16x256xbf16>,
    return
  }
  func.func @transform_0(%arg0: i32, %arg1: i32) -> (i32, i32) {
    %c0_i32 = arith.constant 0 : i32
    %c0_i32_0 = arith.constant 0 : i32
    return %arg0, %c0_i32 : i32, i32
  }
  func.func @transform_1(%arg0: i32, %arg1: i32) -> (i32, i32) {
    %c0_i32 = arith.constant 0 : i32
    %c0_i32_0 = arith.constant 0 : i32
    %c0_i32_1 = arith.constant 0 : i32
    return %c0_i32, %c0_i32_0 : i32, i32
  }
  func.func @transform_2(%arg0: i32, %arg1: i32) -> (i32, i32) {
    %c0_i32 = arith.constant 0 : i32
    %c0_i32_0 = arith.constant 0 : i32
    %c0_i32_1 = arith.constant 0 : i32
    return %c0_i32, %c0_i32_0 : i32, i32
  }
  func.func @transform_3(%arg0: i32, %arg1: i32) -> (i32, i32) {
    %c0_i32 = arith.constant 0 : i32
    %c0_i32_0 = arith.constant 0 : i32
    return %c0_i32, %arg1 : i32, i32
  }
  func.func @transform_4(%arg0: i32, %arg1: i32) -> (i32, i32, i32) {
    %c0_i32 = arith.constant 0 : i32
    %c0_i32_0 = arith.constant 0 : i32
    return %c0_i32, %arg0, %arg1 : i32, i32, i32
  }
}

</mosaic_0001>

<llo_original>
// kernel: tpu_custom_call.1
$region0: #{tpu_custom_call.1}
  #allocation0 [shape = 'u32[]', space=smem, size = 0x4, offset = 0x4, fixed_abs, tag = 'smem constant byte address 0x4 - core index']
  #allocation1 [shape = 'u32[72,128]{1,0:T(1,128)}', space=vmem, size = 0x9000, scoped, tag = 'internal scratch']
  #allocation2 [shape = 'bf16[64,32]{1,0:T(8,128)(2,1)}', space=vmem, size = 0x4000, scoped, tag = 'scratch operand']
  %s0 = inlined_call_operand.hbm [shape: bf16[16,32], index: 0, kind: input, shape index: {}]
  %s1 = inlined_call_operand.hbm [shape: bf16[32,128], index: 1, kind: input, shape index: {}]
  %s2 = inlined_call_operand.vmem [shape: bf16[1,128], index: 2, kind: input, shape index: {}]
  %s3 = inlined_call_operand.hbm [shape: bf16[32,256], index: 3, kind: input, shape index: {}]
  %s4 = inlined_call_operand.hbm [shape: bf16[4,16,256], index: 4, kind: output, shape index: {}]
  %s5 = sld [smem:[#allocation0]]
  $region42: #{tpu_custom_call.1} parent=0
    _
  %s7 = ssub.s32 1, %s5
  %s8 = scalar_select 0, %s7, %s5
  $region1: #{tpu_custom_call.1} parent=0
    #allocation3 [shape = 'u8[4096]{0}', space=vmem, size = 0x1000, scoped, tag = 'input window, operand 0, single buffered']
    #allocation4 [shape = 's32[1]{0}', space=sflag, size = 0x4, scoped, tag = 'scoped memory for tpu_custom_call.1']
    #allocation5 [shape = 's32[1]{0}', space=sflag, size = 0x4, scoped, tag = 'scoped memory for tpu_custom_call.1']
    #allocation6 [shape = 'u8[8192]{0}', space=vmem, size = 0x2000, scoped, tag = 'input window, operand 1, single buffered']
    #allocation7 [shape = 's32[1]{0}', space=sflag, size = 0x4, scoped, tag = 'scoped memory for tpu_custom_call.1']
    #allocation8 [shape = 'u8[16384]{0}', space=vmem, size = 0x4000, scoped, tag = 'input window, operand 3, single buffered']
    #allocation9 [shape = 'u8[32768]{0}', space=vmem, size = 0x8000, scoped, tag = 'output window, operand 0, single buffered']
    %9 = vsyncpa [#allocation4], 0
    %10 = vsyncpa [#allocation7], 0
    %11 = vsyncpa [#allocation5], 0
    // Predicated region
    $region2: #{tpu_custom_call.1} parent=1 // pred_check
      _
    $region3: #{tpu_custom_call.1} parent=1 // pred_check_branch
      %13 = sbr.rel (0) target = $region5
    $region4: #{tpu_custom_call.1} parent=1 // pred_region
      %15 = vsyncadd [#allocation4], 0
      %s16 = sshll.u32 %s0, 4
      %s17 = int_to_ptr.hbm [resolvable:$true] %s16
      %s18 = sshll.u32 [#allocation3], 4
      %s19 = int_to_ptr.vmem [resolvable:$true] %s18
      %24 = dma.hbm_to_vmem [thread:$0]  %s17, 128, %s19, [#allocation4], 64, 64, 4
    $region5: #{tpu_custom_call.1} parent=1 // pred_fallthru
      _
    // Predicated region
    $region6: #{tpu_custom_call.1} parent=1 // pred_check
      _
    $region7: #{tpu_custom_call.1} parent=1 // pred_check_branch
      %26 = sbr.rel (0) target = $region9
    $region8: #{tpu_custom_call.1} parent=1 // pred_region
      %28 = vsyncadd [#allocation7], 0
      %s29 = sshll.u32 %s1, 4
      %s30 = int_to_ptr.hbm [resolvable:$true] %s29
      %s31 = sshll.u32 [#allocation6], 4
      %s32 = int_to_ptr.vmem [resolvable:$true] %s31
      %37 = dma.hbm_to_vmem [thread:$0]  %s30, 256, %s32, [#allocation7], 64, 64, 4
    $region9: #{tpu_custom_call.1} parent=1 // pred_fallthru
      _
    // Predicated region
    $region10: #{tpu_custom_call.1} parent=1 // pred_check
      _
    $region11: #{tpu_custom_call.1} parent=1 // pred_check_branch
      %39 = sbr.rel (0) target = $region13
    $region12: #{tpu_custom_call.1} parent=1 // pred_region
      _
    $region13: #{tpu_custom_call.1} parent=1 // pred_fallthru
      _
    // Predicated region
    $region14: #{tpu_custom_call.1} parent=1 // pred_check
      _
    $region15: #{tpu_custom_call.1} parent=1 // pred_check_branch
      %41 = sbr.rel (0) target = $region17
    $region16: #{tpu_custom_call.1} parent=1 // pred_region
      %43 = vsyncadd [#allocation7], 0
      %s44 = sshll.u32 %s3, 4
      %s45 = int_to_ptr.hbm [resolvable:$true] %s44
      %s46 = sshll.u32 [#allocation8], 4
      %s47 = int_to_ptr.vmem [resolvable:$true] %s46
      %52 = dma.hbm_to_vmem [thread:$0]  %s45, 512, %s47, [#allocation7], 128, 128, 8
    $region17: #{tpu_custom_call.1} parent=1 // pred_fallthru
      _
    // Predicated region
    $region18: #{tpu_custom_call.1} parent=1 // pred_check
      _
    $region19: #{tpu_custom_call.1} parent=1 // pred_check_branch
      %54 = sbr.rel (0) target = $region21
    $region20: #{tpu_custom_call.1} parent=1 // pred_region
      %56 = dma.done [#allocation4], 128
    $region21: #{tpu_custom_call.1} parent=1 // pred_fallthru
      _
    // Predicated region
    $region22: #{tpu_custom_call.1} parent=1 // pred_check
      _
    $region23: #{tpu_custom_call.1} parent=1 // pred_check_branch
      %58 = sbr.rel (0) target = $region25
    $region24: #{tpu_custom_call.1} parent=1 // pred_region
      %60 = dma.done [#allocation7], 256
    $region25: #{tpu_custom_call.1} parent=1 // pred_fallthru
      _
    // Predicated region
    $region26: #{tpu_custom_call.1} parent=1 // pred_check
      _
    $region27: #{tpu_custom_call.1} parent=1 // pred_check_branch
      %62 = sbr.rel (0) target = $region29
    $region28: #{tpu_custom_call.1} parent=1 // pred_region
      %64 = dma.done [#allocation7], 512
    $region29: #{tpu_custom_call.1} parent=1 // pred_fallthru
      _
    %p66 = scmp.eq.s32.totalorder 0, 0
    // Predicated region
    $region30: #{tpu_custom_call.1} parent=1 // pred_check
      %p67 = pneg %p66
    $region31: #{tpu_custom_call.1} parent=1 // pred_check_branch
      %69 = sbr.rel (%p67) target = $region33
    $region32: #{tpu_custom_call.1} parent=1 // pred_region
      %v70 = vld [vmem:[#allocation3] sm:$0xf]
      %v71 = vld [vmem:[#allocation3 + $0x4] sm:$0xf]
      %v72 = vld [vmem:[#allocation6] sm:$0xf]
      %v73 = vld [vmem:[#allocation6 + $0x4] sm:$0xf]
      %v74 = vld [vmem:[#allocation6 + $0x8] sm:$0xf]
      %v75 = vld [vmem:[#allocation6 + $0xc] sm:$0xf]
      %v76 = vld [vmem:[%s2] sm:$0x1]
      %v77 = vunpack.c.l.bf16 %v76
      %v78 = vperm.slane %v77, 0
      %v81 = vunpack.c.l.b16 %v70
      %v82 = vunpack.c.l.b16 %v71
      %v83 = vpack.c.b16 %v82, %v81
      %v88 = vunpack.c.l.b16 %v72
      %v89 = vunpack.c.l.b16 %v73
      %v90 = vunpack.c.l.b16 %v74
      %v91 = vunpack.c.l.b16 %v75
      %v92 = vpack.c.b16 %v89, %v88
      %v93 = vpack.c.b16 %v91, %v90
      %vm96 = vcmask 261120
      %v98 = vsel %vm96, %v83, 0
      %100 = vmatpush.bf16.msra.mxu0 0
      %101 = vmatpush.bf16.msra.mxu0 0
      %102 = vmatpush.bf16.msra.mxu0 0
      %103 = vmatpush.bf16.msra.mxu0 0
      %104 = vmatpush.bf16.msra.mxu0 0
      %105 = vmatpush.bf16.msra.mxu0 0
      %106 = vmatpush.bf16.msra.mxu0 %v93
      %107 = vmatpush.bf16.msra.mxu0 %v92
      %108 = vmatmul.bf16.gmra.mxu0 %v98
      %v109 = vpop.f32.mrf.mxu0
      %v110 = vadd.f32 %v78, %v109
      %v111 = vpop.f32.mrf.mxu0
      %v112 = vadd.f32 %v78, %v111
      %113 = vdwg.mxu0
      %v114 = vunpack.c.l.bf16 %v70
      %v115 = vunpack.c.l.bf16 %v71
      %v116 = vxor.u32 %v110, 2147483648
      %v117 = vxor.u32 %v112, 2147483648
      %v118 = vmul.f32 %v116, 1.442695
      %v119 = vpow.pop %v118
      %v120 = vmul.f32 %v117, 1.442695
      %v121 = vpow.pop %v120
      %v122 = vadd.f32 %v119, 1.0
      %v123 = vadd.f32 %v121, 1.0
      %v124 = vrcp.pop %v122
      %v125 = vmul.f32 %v122, %v124
      %v126 = vsub.f32 1.0, %v125
      %v127 = vmul.f32 %v124, %v126
      %v128 = vadd.f32 %v124, %v127
      %vm129 = vweird.f32 %v122
      %vm130 = vweird.f32 %v124
      %vm131 = vmor %vm129, %vm130
      %v132 = vsel %vm131, %v124, %v128
      %v133 = vand.u32 2147483647, %v122
      %vm134 = vcmp.eq.f32.partialorder %v133, 8.507059e+37
      %v135 = vand.u32 %v122, 2147483648
      %v136 = vor.u32 1.1754944e-38, %v135
      %v137 = vsel %vm134, %v136, %v132
      %v138 = vmul.f32 1.0, %v137
      %v139 = vrcp.pop %v123
      %v140 = vmul.f32 %v123, %v139
      %v141 = vsub.f32 1.0, %v140
      %v142 = vmul.f32 %v139, %v141
      %v143 = vadd.f32 %v139, %v142
      %vm144 = vweird.f32 %v123
      %vm145 = vweird.f32 %v139
      %vm146 = vmor %vm144, %vm145
      %v147 = vsel %vm146, %v139, %v143
      %v148 = vand.u32 2147483647, %v123
      %vm149 = vcmp.eq.f32.partialorder %v148, 8.507059e+37
      %v150 = vand.u32 %v123, 2147483648
      %v151 = vor.u32 1.1754944e-38, %v150
      %v152 = vsel %vm149, %v151, %v147
      %v153 = vmul.f32 1.0, %v152
      %v154 = vmul.f32 %v110, %v138
      %v155 = vmul.f32 %v112, %v153
      %v156 = vadd.f32 %v114, %v154
      %v157 = vadd.f32 %v115, %v155
      %v158 = vpack.c.bf16 %v156, %v156
      %v159 = vpack.c.bf16 %v157, %v157
      %vm160 = vcmask 257024
      %161 = vst.msk [vmem:[#allocation2] sm:$0xf] %vm160, %v158
      %162 = vst.msk [vmem:[#allocation2 + $0x4] sm:$0xf] %vm160, %v159
      %165 = vrot.lane.b32.xlu0 %v154, 96
      %v166 = vpop.permute.xlu0 %165
      %167 = vrot.lane.b32.xlu0 %v155, 96
      %v168 = vpop.permute.xlu0 %167
      %v171 = vadd.f32 %v114, %v166
      %v172 = vadd.f32 %v115, %v168
      %v173 = vpack.c.bf16 %v171, %v171
      %v174 = vpack.c.bf16 %v172, %v172
      %175 = vst.msk [vmem:[#allocation2 + $0x8] sm:$0xf] %vm160, %v173
      %176 = vst.msk [vmem:[#allocation2 + $0xc] sm:$0xf] %vm160, %v174
      %177 = vrot.lane.b32.xlu0 %v154, 64
      %v178 = vpop.permute.xlu0 %177
      %179 = vrot.lane.b32.xlu0 %v155, 64
      %v180 = vpop.permute.xlu0 %179
      %v183 = vadd.f32 %v114, %v178
      %v184 = vadd.f32 %v115, %v180
      %v185 = vpack.c.bf16 %v183, %v183
      %v186 = vpack.c.bf16 %v184, %v184
      %187 = vst.msk [vmem:[#allocation2 + $0x10] sm:$0xf] %vm160, %v185
      %188 = vst.msk [vmem:[#allocation2 + $0x14] sm:$0xf] %vm160, %v186
      %189 = vrot.lane.b32.xlu0 %v154, 32
      %v190 = vpop.permute.xlu0 %189
      %191 = vrot.lane.b32.xlu0 %v155, 32
      %v192 = vpop.permute.xlu0 %191
      %v195 = vadd.f32 %v114, %v190
      %v196 = vadd.f32 %v115, %v192
      %v197 = vpack.c.bf16 %v195, %v195
      %v198 = vpack.c.bf16 %v196, %v196
      %199 = vst.msk [vmem:[#allocation2 + $0x18] sm:$0xf] %vm160, %v197
      %200 = vst.msk [vmem:[#allocation2 + $0x1c] sm:$0xf] %vm160, %v198
    $region33: #{tpu_custom_call.1} parent=1 // pred_fallthru
      _
    %v201 = vld [vmem:[#allocation2] sm:$0xf]
    %v202 = vld [vmem:[#allocation2 + $0x4] sm:$0xf]
    %v203 = vld [vmem:[#allocation2 + $0x8] sm:$0xf]
    %v204 = vld [vmem:[#allocation2 + $0xc] sm:$0xf]
    %v205 = vld [vmem:[#allocation2 + $0x10] sm:$0xf]
    %v206 = vld [vmem:[#allocation2 + $0x14] sm:$0xf]
    %v207 = vld [vmem:[#allocation2 + $0x18] sm:$0xf]
    %v208 = vld [vmem:[#allocation2 + $0x1c] sm:$0xf]
    %v209 = vld [vmem:[#allocation8] sm:$0xff]
    %v210 = vld [vmem:[#allocation8 + $0x8] sm:$0xff]
    %v211 = vld [vmem:[#allocation8 + $0x10] sm:$0xff]
    %v212 = vld [vmem:[#allocation8 + $0x18] sm:$0xff]
    %v221 = vunpack.c.l.b16 %v201
    %v222 = vunpack.c.l.b16 %v202
    %v223 = vunpack.c.l.b16 %v203
    %v224 = vunpack.c.l.b16 %v204
    %v225 = vunpack.c.l.b16 %v205
    %v226 = vunpack.c.l.b16 %v206
    %v227 = vunpack.c.l.b16 %v207
    %v228 = vunpack.c.l.b16 %v208
    %v229 = vpack.c.b16 %v222, %v221
    %v230 = vpack.c.b16 %v224, %v223
    %v231 = vpack.c.b16 %v226, %v225
    %v232 = vpack.c.b16 %v228, %v227
    %v237 = vunpack.c.l.b16 %v209
    %v238 = vunpack.c.h.b16 %v209
    %v239 = vunpack.c.l.b16 %v210
    %v240 = vunpack.c.h.b16 %v210
    %v241 = vunpack.c.l.b16 %v211
    %v242 = vunpack.c.h.b16 %v211
    %v243 = vunpack.c.l.b16 %v212
    %v244 = vunpack.c.h.b16 %v212
    %v245 = vpack.c.b16 %v239, %v237
    %v246 = vpack.c.b16 %v240, %v238
    %v247 = vpack.c.b16 %v243, %v241
    %v248 = vpack.c.b16 %v244, %v242
    %vm253 = vcmask 261120
    %v255 = vsel %vm253, %v229, 0
    %v258 = vsel %vm253, %v230, 0
    %v261 = vsel %vm253, %v231, 0
    %v264 = vsel %vm253, %v232, 0
    %266 = vmatpush.bf16.msra.mxu0 0
    %267 = vmatpush.bf16.msra.mxu0 0
    %268 = vmatpush.bf16.msra.mxu0 0
    %269 = vmatpush.bf16.msra.mxu0 0
    %270 = vmatpush.bf16.msra.mxu0 0
    %271 = vmatpush.bf16.msra.mxu0 0
    %272 = vmatpush.bf16.msra.mxu0 %v247
    %273 = vmatpush.bf16.msra.mxu0 %v245
    %274 = vmatmul.bf16.gmra.mxu0 %v255
    %v275 = vpop.f32.mrf.mxu0
    %v276 = vadd.f32 0.0, %v275
    %v277 = vpop.f32.mrf.mxu0
    %v278 = vadd.f32 0.0, %v277
    %279 = vmatmul.bf16.gmra.mxu0 %v258
    %v280 = vpop.f32.mrf.mxu0
    %v281 = vadd.f32 0.0, %v280
    %v282 = vpop.f32.mrf.mxu0
    %v283 = vadd.f32 0.0, %v282
    %284 = vmatmul.bf16.gmra.mxu0 %v261
    %v285 = vpop.f32.mrf.mxu0
    %v286 = vadd.f32 0.0, %v285
    %v287 = vpop.f32.mrf.mxu0
    %v288 = vadd.f32 0.0, %v287
    %289 = vmatmul.bf16.gmra.mxu0 %v264
    %v290 = vpop.f32.mrf.mxu0
    %v291 = vadd.f32 0.0, %v290
    %v292 = vpop.f32.mrf.mxu0
    %v293 = vadd.f32 0.0, %v292
    %294 = vdwg.mxu0
    %295 = vmatpush.bf16.msra.mxu0 0
    %296 = vmatpush.bf16.msra.mxu0 0
    %297 = vmatpush.bf16.msra.mxu0 0
    %298 = vmatpush.bf16.msra.mxu0 0
    %299 = vmatpush.bf16.msra.mxu0 0
    %300 = vmatpush.bf16.msra.mxu0 0
    %301 = vmatpush.bf16.msra.mxu0 %v248
    %302 = vmatpush.bf16.msra.mxu0 %v246
    %303 = vmatmul.bf16.gmra.mxu0 %v255
    %v304 = vpop.f32.mrf.mxu0
    %v305 = vadd.f32 0.0, %v304
    %v306 = vpop.f32.mrf.mxu0
    %v307 = vadd.f32 0.0, %v306
    %308 = vmatmul.bf16.gmra.mxu0 %v258
    %v309 = vpop.f32.mrf.mxu0
    %v310 = vadd.f32 0.0, %v309
    %v311 = vpop.f32.mrf.mxu0
    %v312 = vadd.f32 0.0, %v311
    %313 = vmatmul.bf16.gmra.mxu0 %v261
    %v314 = vpop.f32.mrf.mxu0
    %v315 = vadd.f32 0.0, %v314
    %v316 = vpop.f32.mrf.mxu0
    %v317 = vadd.f32 0.0, %v316
    %318 = vmatmul.bf16.gmra.mxu0 %v264
    %v319 = vpop.f32.mrf.mxu0
    %v320 = vadd.f32 0.0, %v319
    %v321 = vpop.f32.mrf.mxu0
    %v322 = vadd.f32 0.0, %v321
    %323 = vdwg.mxu0
    %v324 = vpack.c.bf16 %v305, %v276
    %v325 = vpack.c.bf16 %v307, %v278
    %326 = vst [vmem:[#allocation9] sm:$0xff] %v324
    %327 = vst [vmem:[#allocation9 + $0x8] sm:$0xff] %v325
    %v328 = vpack.c.bf16 %v310, %v281
    %v329 = vpack.c.bf16 %v312, %v283
    %s330 = scalar_lea.vmem [#allocation9], 16
    %331 = vst [vmem:[%s330] sm:$0xff] %v328
    %332 = vst [vmem:[%s330 + $0x8] sm:$0xff] %v329
    %v333 = vpack.c.bf16 %v315, %v286
    %v334 = vpack.c.bf16 %v317, %v288
    %s335 = scalar_lea.vmem [#allocation9], 32
    %336 = vst [vmem:[%s335] sm:$0xff] %v333
    %337 = vst [vmem:[%s335 + $0x8] sm:$0xff] %v334
    %v338 = vpack.c.bf16 %v320, %v291
    %v339 = vpack.c.bf16 %v322, %v293
    %s340 = scalar_lea.vmem [#allocation9], 48
    %341 = vst [vmem:[%s340] sm:$0xff] %v338
    %342 = vst [vmem:[%s340 + $0x8] sm:$0xff] %v339
    // Predicated region
    $region34: #{tpu_custom_call.1} parent=1 // pred_check
      _
    $region35: #{tpu_custom_call.1} parent=1 // pred_check_branch
      %344 = sbr.rel (0) target = $region37
    $region36: #{tpu_custom_call.1} parent=1 // pred_region
      %346 = vsyncadd [#allocation5], 0
      %s347 = sshll.u32 [#allocation9], 4
      %s348 = int_to_ptr.vmem [resolvable:$true] %s347
      %s349 = sshll.u32 %s4, 4
      %s350 = int_to_ptr.hbm [resolvable:$true] %s349
      %355 = dma.vmem_to_hbm [thread:$0]  %s348, 1024, %s350, [#allocation5], 128, 128, 8
    $region37: #{tpu_custom_call.1} parent=1 // pred_fallthru
      _
    // Predicated region
    $region38: #{tpu_custom_call.1} parent=1 // pred_check
      _
    $region39: #{tpu_custom_call.1} parent=1 // pred_check_branch
      %357 = sbr.rel (0) target = $region41
    $region40: #{tpu_custom_call.1} parent=1 // pred_region
      %359 = dma.done [#allocation5], 1024
    $region41: #{tpu_custom_call.1} parent=1 // pred_fallthru
      _
    %360 = vsyncpa [#allocation4], 1
    %361 = vsyncpa [#allocation7], 1
    %362 = vsyncpa [#allocation5], 1

</llo_original>
